<compile_context>
chip_gen: v5e
topology: v5e:2x2
jax: 0.10.0
libtpu: 0.0.40
codegen_flags: <defaults>
</compile_context>

<pallas_src>
import functools

import jax
import jax.numpy as jnp
from jax.experimental import pallas as pl
from jax.experimental.pallas import tpu as pltpu


def _vmem_limit_bytes():
    """Per-generation VMEM budget (v7x: 64 MiB physical, v5e/v6e: 128 MiB)."""
    cap = 64 * 1024 * 1024
    try:
        info = pltpu.get_tpu_info()
        cap = int(getattr(info, "vmem_capacity_bytes", cap)) or cap
    except Exception:
        pass
    return min(100 * 1024 * 1024, cap * 3 // 4)


def _pick_batch_block(n, bytes_per_row, vmem_limit):
    """Largest divisor of n whose per-step working set stays inside ~half the
    VMEM budget (headroom left for double buffering / compiler scratch)."""
    budget = max(vmem_limit // 2, 1)
    nb = max(1, min(n, budget // max(bytes_per_row, 1)))
    while n % nb:
        nb -= 1
    return nb


def _tap_groups(k, c_in, cap=128):
    """Group conv taps so each fused contraction depth stays <= cap (v5e MXU)."""
    per = max(1, cap // max(c_in, 1))
    groups, rem = [], k
    while rem > 0:
        g = min(per, rem)
        groups.append(g)
        rem -= g
    return tuple(groups)


def conv_bn_relu_stats_kernel(x_ref, scale_ref, shift_ref, w_ref,
                              y_ref, stats_ref, *, pad, apply_relu, groups):
    """One CNNBlock step: fold previous layer's BN (+ReLU) into this conv.

    x_ref     : (NB, L, Cin)  raw previous conv output (or network input), f32
    scale_ref : (1, Cin)      gamma * rsqrt(var + eps)   (identity for layer 0)
    shift_ref : (1, Cin)      beta - mean * scale        (zero for layer 0)
    w_ref     : (K*Cin, Cout) fused-tap conv weight, bf16
    y_ref     : (NB, L, Cout) this layer's raw conv output, f32
    stats_ref : (1, 2, Cout)  per-grid-step partial [sum, sum of squares]
    """
    nb, length, c_in = x_ref.shape
    cout = y_ref.shape[-1]

    # Previous layer's folded BatchNorm (one FMA/element) + ReLU, in f32.
    h = x_ref[...].astype(jnp.float32) * scale_ref[...] + shift_ref[...]
    if apply_relu:
        h = jnp.maximum(h, 0.0)
    h = h.astype(jnp.bfloat16)

    # Zero 'same'-padding borders built in VMEM only (never stored to HBM).
    if pad:
        z = jnp.zeros((nb, pad, c_in), jnp.bfloat16)
        h = jnp.concatenate([z, h, z], axis=1)          # (NB, L + 2*pad, Cin)

    # Fused-tap convolution: one MXU matmul per tap group.  Batch and L are
    # flattened into the row dimension for better MXU utilization.
    acc = jnp.zeros((nb * length, cout), jnp.float32)
    tap = 0
    for g in groups:                                     # static unroll, K small
        lhs = jnp.concatenate(
            [h[:, t:t + length, :] for t in range(tap, tap + g)], axis=-1)
        lhs = lhs.reshape(nb * length, g * c_in)
        w_g = w_ref[tap * c_in:(tap + g) * c_in, :]
        acc = acc + jnp.dot(lhs, w_g, preferred_element_type=jnp.float32)
        tap += g

    y_ref[...] = acc.reshape(nb, length, cout).astype(y_ref.dtype)

    # Per-step partial batch statistics in sum / sum-of-squares form (f32).
    # NOTE: E[y^2] - E[y]^2 can cancel for large-mean activations; conv outputs
    # here are near zero-mean and everything is f32, so this is well within tol.
    stats_ref[0] = jnp.concatenate(
        [jnp.sum(acc, axis=0, keepdims=True),
         jnp.sum(acc * acc, axis=0, keepdims=True)], axis=0)


def bn_relu_kernel(y_ref, scale_ref, shift_ref, o_ref):
    """Folded BatchNorm + ReLU for the final layer (full aligned block store)."""
    y = y_ref[...].astype(jnp.float32)
    o_ref[...] = jnp.maximum(y * scale_ref[...] + shift_ref[...], 0.0
                             ).astype(o_ref.dtype)


def conv_layer(x, scale, shift, w, *, apply_relu, vmem_limit):
    """One fused CNNBlock step.  x: (N, L, Cin) f32 raw previous conv output.
    Returns (y: (N, L, Cout) f32 raw conv output, stats: (2, Cout) f32 sums)."""
    n, length, c_in = x.shape
    cout, c_in_w, k = w.shape
    assert c_in_w == c_in, (c_in_w, c_in)
    assert k % 2 == 1, "padding='same' with stride=1 assumes an odd kernel size"
    pad = k // 2
    groups = _tap_groups(k, c_in)

    # (Cout, Cin, K) -> (K*Cin, Cout) fused-tap weight, bf16 for the MXU.
    w_f = jnp.transpose(w, (2, 1, 0)).reshape(k * c_in, cout).astype(jnp.bfloat16)

    bytes_per_row = (
        length * c_in * 4 * 2             # input block (double-buffered), f32
        + (length + 2 * pad) * c_in * 2   # padded activation, bf16
        + length * k * c_in * 2           # fused lhs operand, bf16
        + length * cout * 4               # f32 accumulator
        + length * cout * 4 * 2           # y output block (double-buffered)
    )
    nb = _pick_batch_block(n, bytes_per_row, vmem_limit)
    steps = n // nb

    y, stats = pl.pallas_call(
        functools.partial(conv_bn_relu_stats_kernel, pad=pad,
                          apply_relu=apply_relu, groups=groups),
        grid=(steps,),
        in_specs=[
            pl.BlockSpec((nb, length, c_in), lambda i: (i, 0, 0)),
            pl.BlockSpec((1, c_in), lambda i: (0, 0)),
            pl.BlockSpec((1, c_in), lambda i: (0, 0)),
            pl.BlockSpec((k * c_in, cout), lambda i: (0, 0)),
        ],
        out_specs=[
            pl.BlockSpec((nb, length, cout), lambda i: (i, 0, 0)),
            pl.BlockSpec((1, 2, cout), lambda i: (i, 0, 0)),
        ],
        out_shape=[
            jax.ShapeDtypeStruct((n, length, cout), jnp.float32),
            jax.ShapeDtypeStruct((steps, 2, cout), jnp.float32),
        ],
        compiler_params=pltpu.CompilerParams(
            dimension_semantics=("parallel",),       # no resident accumulator
            vmem_limit_bytes=vmem_limit),
    )(x, scale, shift, w_f)

    return y, jnp.sum(stats, axis=0)                  # tiny (2, Cout) reduction


def final_bn_relu(y, scale, shift, *, vmem_limit):
    n, length, c = y.shape
    bytes_per_row = length * c * 4 * 5
    nb = _pick_batch_block(n, bytes_per_row, vmem_limit)
    return pl.pallas_call(
        bn_relu_kernel,
        grid=(n // nb,),
        in_specs=[
            pl.BlockSpec((nb, length, c), lambda i: (i, 0, 0)),
            pl.BlockSpec((1, c), lambda i: (0, 0)),
            pl.BlockSpec((1, c), lambda i: (0, 0)),
        ],
        out_specs=pl.BlockSpec((nb, length, c), lambda i: (i, 0, 0)),
        out_shape=jax.ShapeDtypeStruct((n, length, c), jnp.float32),
        compiler_params=pltpu.CompilerParams(
            dimension_semantics=("parallel",),
            vmem_limit_bytes=vmem_limit),
    )(y, scale, shift)


def cnn_blocks_forward(x, params, *, eps=1e-5):
    """x: (N, Cin, L) f32.  params: list of (w (Cout,Cin,K), gamma (Cout,), beta (Cout,)).
    Returns (N, Cout_last, L) f32, matching PyTorch CNNBlocks.forward (train-mode BN)."""
    n, cin, length = x.shape
    vmem_limit = _vmem_limit_bytes()
    inv_count = 1.0 / float(n * length)

    # single NCL -> NLC transpose at the network boundary
    h = jnp.transpose(x, (0, 2, 1)).astype(jnp.float32)

    # layer 0 sees the raw input: identity affine, no ReLU
    scale = jnp.ones((1, cin), jnp.float32)
    shift = jnp.zeros((1, cin), jnp.float32)
    apply_relu = False

    for w, gamma, beta in params:
        cout = w.shape[0]
        h, stats = conv_layer(h, scale, shift, w,
                              apply_relu=apply_relu, vmem_limit=vmem_limit)
        mean = stats[0] * inv_count
        var = jnp.maximum(stats[1] * inv_count - mean * mean, 0.0)
        s = gamma.astype(jnp.float32) * jax.lax.rsqrt(var + eps)
        scale = s.reshape(1, cout)
        shift = (beta.astype(jnp.float32) - mean * s).reshape(1, cout)
        apply_relu = True

    out = final_bn_relu(h, scale, shift, vmem_limit=vmem_limit)   # (N, L, Cout)
    return jnp.transpose(out, (0, 2, 1))                          # back to NCL


def reference(x, params, eps=1e-5):
    """Pure-JAX f32 reference of the PyTorch forward (Conv1d + train-mode BN + ReLU)."""
    h = x
    for w, gamma, beta in params:
        y = jax.lax.conv_general_dilated(
            h, w, window_strides=(1,), padding="SAME",
            dimension_numbers=("NCH", "OIH", "NCH"))
        mean = jnp.mean(y, axis=(0, 2), keepdims=True)
        var = jnp.mean((y - mean) ** 2, axis=(0, 2), keepdims=True)
        yn = (y - mean) / jnp.sqrt(var + eps)
        yn = yn * gamma[None, :, None] + beta[None, :, None]
        h = jnp.maximum(yn, 0.0)
    return h


if __name__ == "__main__":
    # CNNBlocks(n_conv=3, in_channels=4, out_channels=8, padding='same')
    n_conv, n, cin, cout, length, k = 3, 2, 4, 8, 16, 3

    key = jax.random.PRNGKey(0)
    kx, *kws = jax.random.split(key, n_conv + 1)

    x = jax.random.normal(kx, (n, cin, length), dtype=jnp.float32)

    params = []
    c_in = cin
    for i in range(n_conv):
        fan_in = c_in * k
        w = jax.random.uniform(kws[i], (cout, c_in, k), dtype=jnp.float32,
                               minval=-1.0, maxval=1.0) * (1.0 / (fan_in ** 0.5))
        gamma = jnp.ones((cout,), dtype=jnp.float32)   # fresh BatchNorm1d weight
        beta = jnp.zeros((cout,), dtype=jnp.float32)   # fresh BatchNorm1d bias
        params.append((w, gamma, beta))
        c_in = cout

    out = jax.block_until_ready(cnn_blocks_forward(x, params))
    ref = jax.block_until_ready(reference(x, params))

    assert out.shape == (n, cout, length), out.shape
    err = float(jnp.max(jnp.abs(out - ref)))
    # bf16 MXU operands vs. a pure-f32 reference (activations now stay f32)
    assert jnp.allclose(out, ref, rtol=2e-2, atol=2e-2), err

    print("KERNEL_OK")
</pallas_src>

<mosaic_0001>
module attributes {stable_mosaic.version = 11 : i64} {
  func.func @conv_bn_relu_stats_kernel(%arg0: i32, %arg1: memref<2x16x4xf32, #tpu.memory_space<vmem>>, %arg2: memref<1x4xf32, #tpu.memory_space<vmem>>, %arg3: memref<1x4xf32, #tpu.memory_space<vmem>>, %arg4: memref<12x8xbf16, #tpu.memory_space<vmem>>, %arg5: memref<2x16x8xf32, #tpu.memory_space<vmem>>, %arg6: memref<1x2x8xf32, #tpu.memory_space<vmem>>) attributes {dimension_semantics = [#tpu.dimension_semantics<parallel>], iteration_bounds = array<i64: 1>, scalar_prefetch = 0 : i64, scratch_operands = 0 : i64, tpu.core_type = #tpu.core_type<tc>, window_params = [{transform_indices = @transform_0, window_bounds = array<i64: 2, 16, 4>}, {pipeline_mode = #tpu.pipeline_mode<synchronous>, transform_indices = @transform_1, window_bounds = array<i64: 1, 4>}, {pipeline_mode = #tpu.pipeline_mode<synchronous>, transform_indices = @transform_2, window_bounds = array<i64: 1, 4>}, {pipeline_mode = #tpu.pipeline_mode<synchronous>, transform_indices = @transform_3, window_bounds = array<i64: 12, 8>}, {transform_indices = @transform_4, window_bounds = array<i64: 2, 16, 8>}, {transform_indices = @transform_5, window_bounds = array<i64: 1, 2, 8>}]} {
    %c0 = arith.constant 0 : index
    %c0_0 = arith.constant 0 : index
    %c0_1 = arith.constant 0 : index
    %0 = vector.load %arg1[%c0, %c0_0, %c0_1] : memref<2x16x4xf32, #tpu.memory_space<vmem>>, vector<2x16x4xf32>
    %c0_2 = arith.constant 0 : index
    %c0_3 = arith.constant 0 : index
    %1 = vector.load %arg2[%c0_2, %c0_3] : memref<1x4xf32, #tpu.memory_space<vmem>>, vector<1x4xf32>
    %2 = vector.shape_cast %1 : vector<1x4xf32> to vector<1x1x4xf32>
    %3 = vector.broadcast %2 : vector<1x1x4xf32> to vector<2x16x4xf32>
    %4 = arith.mulf %0, %3 : vector<2x16x4xf32>
    %c0_4 = arith.constant 0 : index
    %c0_5 = arith.constant 0 : index
    %5 = vector.load %arg3[%c0_4, %c0_5] : memref<1x4xf32, #tpu.memory_space<vmem>>, vector<1x4xf32>
    %6 = vector.shape_cast %5 : vector<1x4xf32> to vector<1x1x4xf32>
    %7 = vector.broadcast %6 : vector<1x1x4xf32> to vector<2x16x4xf32>
    %8 = arith.addf %4, %7 : vector<2x16x4xf32>
    %9 = arith.truncf %8 : vector<2x16x4xf32> to vector<2x16x4xbf16>
    %cst = arith.constant 0.000000e+00 : bf16
    %10 = vector.broadcast %cst : bf16 to vector<2x1x4xbf16>
    %11 = tpu.concatenate %10, %9, %10 in 1 : vector<2x1x4xbf16>, vector<2x16x4xbf16>, vector<2x1x4xbf16> -> vector<2x18x4xbf16>
    %cst_6 = arith.constant 0.000000e+00 : f32
    %12 = vector.broadcast %cst_6 : f32 to vector<32x8xf32>
    %13 = vector.extract_strided_slice %11 {offsets = [0, 0, 0], sizes = [2, 16, 4], strides = [1, 1, 1]} : vector<2x18x4xbf16> to vector<2x16x4xbf16>
    %14 = vector.extract_strided_slice %11 {offsets = [0, 1, 0], sizes = [2, 16, 4], strides = [1, 1, 1]} : vector<2x18x4xbf16> to vector<2x16x4xbf16>
    %15 = vector.extract_strided_slice %11 {offsets = [0, 2, 0], sizes = [2, 16, 4], strides = [1, 1, 1]} : vector<2x18x4xbf16> to vector<2x16x4xbf16>
    %16 = tpu.concatenate %13, %14, %15 in 2 : vector<2x16x4xbf16>, vector<2x16x4xbf16>, vector<2x16x4xbf16> -> vector<2x16x12xbf16>
    %17 = vector.shape_cast %16 : vector<2x16x12xbf16> to vector<32x12xbf16>
    %c0_7 = arith.constant 0 : index
    %c0_8 = arith.constant 0 : index
    %18 = vector.load %arg4[%c0_7, %c0_8] : memref<12x8xbf16, #tpu.memory_space<vmem>>, vector<12x8xbf16>
    %cst_9 = arith.constant dense<0.000000e+00> : vector<32x8xf32>
    %19 = tpu.matmul %17, %18, %cst_9 {dimension_numbers = #tpu.dot_dimension_numbers<[1], [0], [0], [1], [0, 0, 1, 1], [], []>} : vector<32x12xbf16>, vector<12x8xbf16>, vector<32x8xf32> -> vector<32x8xf32>
    %20 = arith.addf %12, %19 : vector<32x8xf32>
    %21 = vector.shape_cast %20 : vector<32x8xf32> to vector<2x16x8xf32>
    %c0_10 = arith.constant 0 : index
    %c0_11 = arith.constant 0 : index
    %c0_12 = arith.constant 0 : index
    %22 = vector.load %arg5[%c0_10, %c0_11, %c0_12] : memref<2x16x8xf32, #tpu.memory_space<vmem>>, vector<2x16x8xf32>
    tpu.vector_store %arg5[%c0_10, %c0_11, %c0_12], %21 {strides = array<i32>} : memref<2x16x8xf32, #tpu.memory_space<vmem>>, vector<2x16x8xf32>,
    %cst_13 = arith.constant dense<0.000000e+00> : vector<8xf32>
    %23 = vector.multi_reduction <add>, %20, %cst_13 [0] : vector<32x8xf32> to vector<8xf32>
    %24 = vector.shape_cast %23 : vector<8xf32> to vector<1x8xf32>
    %25 = arith.mulf %20, %20 : vector<32x8xf32>
    %cst_14 = arith.constant dense<0.000000e+00> : vector<8xf32>
    %26 = vector.multi_reduction <add>, %25, %cst_14 [0] : vector<32x8xf32> to vector<8xf32>
    %27 = vector.shape_cast %26 : vector<8xf32> to vector<1x8xf32>
    %28 = tpu.concatenate %24, %27 in 0 : vector<1x8xf32>, vector<1x8xf32> -> vector<2x8xf32>
    %c0_15 = arith.constant 0 : index
    %c0_16 = arith.constant 0 : index
    %c0_17 = arith.constant 0 : index
    %29 = vector.load %arg6[%c0_15, %c0_16, %c0_17] : memref<1x2x8xf32, #tpu.memory_space<vmem>>, vector<1x2x8xf32>
    %30 = vector.shape_cast %29 : vector<1x2x8xf32> to vector<2x8xf32>
    %31 = vector.shape_cast %28 : vector<2x8xf32> to vector<1x2x8xf32>
    tpu.vector_store %arg6[%c0_15, %c0_16, %c0_17], %31 {strides = array<i32>} : memref<1x2x8xf32, #tpu.memory_space<vmem>>, vector<1x2x8xf32>,
    return
  }
  func.func @transform_0(%arg0: i32) -> (i32, i32, i32) {
    %c0_i32 = arith.constant 0 : i32
    %c0_i32_0 = arith.constant 0 : i32
    %c0_i32_1 = arith.constant 0 : i32
    return %arg0, %c0_i32, %c0_i32_0 : i32, i32, i32
  }
  func.func @transform_1(%arg0: i32) -> (i32, i32) {
    %c0_i32 = arith.constant 0 : i32
    %c0_i32_0 = arith.constant 0 : i32
    %c0_i32_1 = arith.constant 0 : i32
    return %c0_i32, %c0_i32_0 : i32, i32
  }
  func.func @transform_2(%arg0: i32) -> (i32, i32) {
    %c0_i32 = arith.constant 0 : i32
    %c0_i32_0 = arith.constant 0 : i32
    %c0_i32_1 = arith.constant 0 : i32
    return %c0_i32, %c0_i32_0 : i32, i32
  }
  func.func @transform_3(%arg0: i32) -> (i32, i32) {
    %c0_i32 = arith.constant 0 : i32
    %c0_i32_0 = arith.constant 0 : i32
    %c0_i32_1 = arith.constant 0 : i32
    return %c0_i32, %c0_i32_0 : i32, i32
  }
  func.func @transform_4(%arg0: i32) -> (i32, i32, i32) {
    %c0_i32 = arith.constant 0 : i32
    %c0_i32_0 = arith.constant 0 : i32
    %c0_i32_1 = arith.constant 0 : i32
    return %arg0, %c0_i32, %c0_i32_0 : i32, i32, i32
  }
  func.func @transform_5(%arg0: i32) -> (i32, i32, i32) {
    %c0_i32 = arith.constant 0 : i32
    %c0_i32_0 = arith.constant 0 : i32
    %c0_i32_1 = arith.constant 0 : i32
    return %arg0, %c0_i32, %c0_i32_0 : i32, i32, i32
  }
}

</mosaic_0001>

<llo_original>
// kernel: tpu_custom_call.1
$region0: #{tpu_custom_call.1}
  #allocation0 [shape = 'u32[]', space=smem, size = 0x4, offset = 0x4, fixed_abs, tag = 'smem constant byte address 0x4 - core index']
  #allocation1 [shape = 'u32[72,128]{1,0:T(1,128)}', space=vmem, size = 0x9000, scoped, tag = 'internal scratch']
  %s0 = inlined_call_operand.vmem [shape: f32[2,16,4], index: 0, kind: input, shape index: {}]
  %s1 = inlined_call_operand.vmem [shape: f32[1,4], index: 1, kind: input, shape index: {}]
  %s2 = inlined_call_operand.vmem [shape: f32[1,4], index: 2, kind: input, shape index: {}]
  %s3 = inlined_call_operand.vmem [shape: bf16[12,8], index: 3, kind: input, shape index: {}]
  %s4 = inlined_call_operand.vmem [shape: f32[2,16,8], index: 4, kind: output, shape index: {0}]
  %s5 = inlined_call_operand.hbm [shape: f32[1,2,8], index: 5, kind: output, shape index: {1}]
  %6 = xla_tuple %s4, %s5
  %s7 = sld [smem:[#allocation0]]
  $region34: #{tpu_custom_call.1} parent=0
    _
  %s9 = ssub.s32 1, %s7
  %s10 = scalar_select 0, %s9, %s7
  $region1: #{tpu_custom_call.1} parent=0
    #allocation2 [shape = 'u8[1024]{0}', space=vmem, size = 0x400, scoped, tag = 'output window, operand 1, single buffered']
    #allocation3 [shape = 's32[1]{0}', space=sflag, size = 0x4, scoped, tag = 'scoped memory for tpu_custom_call.1']
    %11 = vsyncpa [#allocation3], 0
    // Predicated region
    $region2: #{tpu_custom_call.1} parent=1 // pred_check
      _
    $region3: #{tpu_custom_call.1} parent=1 // pred_check_branch
      %13 = sbr.rel (0) target = $region5
    $region4: #{tpu_custom_call.1} parent=1 // pred_region
      _
    $region5: #{tpu_custom_call.1} parent=1 // pred_fallthru
      _
    // Predicated region
    $region6: #{tpu_custom_call.1} parent=1 // pred_check
      _
    $region7: #{tpu_custom_call.1} parent=1 // pred_check_branch
      %15 = sbr.rel (0) target = $region9
    $region8: #{tpu_custom_call.1} parent=1 // pred_region
      _
    $region9: #{tpu_custom_call.1} parent=1 // pred_fallthru
      _
    // Predicated region
    $region10: #{tpu_custom_call.1} parent=1 // pred_check
      _
    $region11: #{tpu_custom_call.1} parent=1 // pred_check_branch
      %17 = sbr.rel (0) target = $region13
    $region12: #{tpu_custom_call.1} parent=1 // pred_region
      _
    $region13: #{tpu_custom_call.1} parent=1 // pred_fallthru
      _
    // Predicated region
    $region14: #{tpu_custom_call.1} parent=1 // pred_check
      _
    $region15: #{tpu_custom_call.1} parent=1 // pred_check_branch
      %19 = sbr.rel (0) target = $region17
    $region16: #{tpu_custom_call.1} parent=1 // pred_region
      _
    $region17: #{tpu_custom_call.1} parent=1 // pred_fallthru
      _
    %v21 = vld [vmem:[%s0] sm:$0xff]
    %v22 = vld [vmem:[%s0 + $0x8] sm:$0xff]
    %v23 = vld [vmem:[%s0 + $0x10] sm:$0xff]
    %v24 = vld [vmem:[%s0 + $0x18] sm:$0xff]
    %v25 = vld [vmem:[%s1] sm:$0x1]
    %v27 = vperm.slane %v25, 0
    %v29 = vmul.f32 %v21, %v27
    %v30 = vmul.f32 %v22, %v27
    %v31 = vmul.f32 %v23, %v27
    %v32 = vmul.f32 %v24, %v27
    %v33 = vld [vmem:[%s2] sm:$0x1]
    %v35 = vperm.slane %v33, 0
    %v37 = vadd.f32 %v29, %v35
    %v38 = vadd.f32 %v30, %v35
    %v39 = vadd.f32 %v31, %v35
    %v40 = vadd.f32 %v32, %v35
    %v41 = vpack.c.bf16 %v37, %v37
    %v42 = vpack.c.bf16 %v38, %v38
    %v43 = vpack.c.bf16 %v39, %v39
    %v44 = vpack.c.bf16 %v40, %v40
    %v49 = vunpack.c.l.b16 %v41
    %v50 = vunpack.c.l.b16 %v42
    %v51 = vunpack.c.l.b16 %v43
    %v52 = vunpack.c.l.b16 %v44
    %v53 = vpack.c.b16 %v50, %v49
    %v54 = vpack.c.b16 %v52, %v51
    %v56 = vshrl.u32 %v53, 16
    %v58 = vrot.slane %v56, 7
    %v59 = vshll.u32 %v53, 16
    %v61 = vor.u32 %v58, %v59
    %v63 = vshrl.u32 %v54, 16
    %v65 = vrot.slane %v63, 7
    %v66 = vshll.u32 %v54, 16
    %v68 = vor.u32 %v65, %v66
    %vm73 = vcmask 1040384
    %vm74 = vsmask.f32 256
    %vm75 = vmand %vm73, %vm74
    %v76 = vsel %vm75, 0, %v61
    %v77 = vsel %vm75, 0, %v68
    %v78 = vsel %vm75, %v58, 0
    %v79 = vsel %vm75, %v65, 0
    %vm80 = vsmask.f32 7424
    %v82 = vshrl.u32 %v76, 16
    %v84 = vshll.u32 %v76, 16
    %v86 = vrot.slane %v84, 1
    %v87 = vor.u32 %v82, %v86
    %v89 = vshll.u32 %v78, 16
    %v91 = vrot.slane %v89, 1
    %v92 = vsel %vm80, %v87, %v91
    %v94 = vshrl.u32 %v77, 16
    %v96 = vshll.u32 %v77, 16
    %v98 = vrot.slane %v96, 1
    %v99 = vor.u32 %v94, %v98
    %v101 = vshll.u32 %v79, 16
    %v103 = vrot.slane %v101, 1
    %v104 = vsel %vm80, %v99, %v103
    %105 = vrot.lane.b32.xlu0 %v92, 4
    %v106 = vpop.permute.xlu0 %105
    %107 = vrot.lane.b32.xlu0 %v104, 4
    %v108 = vpop.permute.xlu0 %107
    %vm113 = vcmask 1046528
    %v114 = vrot.slane %v76, 1
    %v115 = vrot.slane %v78, 1
    %v116 = vsel %vm113, %v114, %v115
    %v117 = vrot.slane %v77, 1
    %v118 = vrot.slane %v79, 1
    %v119 = vsel %vm113, %v117, %v118
    %120 = vrot.lane.b32.xlu0 %v116, 8
    %v121 = vpop.permute.xlu0 %120
    %122 = vrot.lane.b32.xlu0 %v119, 8
    %v123 = vpop.permute.xlu0 %122
    %vm124 = vcmask 31744
    %v126 = vsel %vm124, %v76, %v106
    %v128 = vsel %vm124, %v77, %v108
    %vm129 = vcmask 64512
    %v131 = vsel %vm129, %v126, %v121
    %v133 = vsel %vm129, %v128, %v123
    %v134 = vld [vmem:[%s3] sm:$0xf]
    %v135 = vld [vmem:[%s3 + $0x4] sm:$0x3]
    %v138 = vunpack.c.l.b16 %v134
    %v139 = vunpack.c.l.b16 %v135
    %v140 = vpack.c.b16 %v139, %v138
    %vm141 = vcmask 97280
    %v142 = vsel %vm141, %v131, 0
    %v144 = vsel %vm141, %v133, 0
    %vm146 = vcmask 1045504
    %v148 = vsel %vm146, %v140, 0
    %150 = vmatpush.bf16.msra.mxu0 0
    %151 = vmatpush.bf16.msra.mxu0 0
    %152 = vmatpush.bf16.msra.mxu0 0
    %153 = vmatpush.bf16.msra.mxu0 0
    %154 = vmatpush.bf16.msra.mxu0 0
    %155 = vmatpush.bf16.msra.mxu0 0
    %156 = vmatpush.bf16.msra.mxu0 0
    %157 = vmatpush.bf16.msra.mxu0 %v148
    %158 = vmatmul.bf16.gmra.mxu0 %v142
    %v159 = vpop.f32.mrf.mxu0
    %v160 = vadd.f32 0.0, %v159
    %v161 = vpop.f32.mrf.mxu0
    %v162 = vadd.f32 0.0, %v161
    %163 = vmatmul.bf16.gmra.mxu0 %v144
    %v164 = vpop.f32.mrf.mxu0
    %v165 = vadd.f32 0.0, %v164
    %v166 = vpop.f32.mrf.mxu0
    %v167 = vadd.f32 0.0, %v166
    %168 = vdwg.mxu0
    %169 = vst.msk [vmem:[%s4] sm:$0xff] %vm129, %v160
    %170 = vst.msk [vmem:[%s4 + $0x8] sm:$0xff] %vm129, %v162
    %171 = vst.msk [vmem:[%s4 + $0x10] sm:$0xff] %vm129, %v165
    %172 = vst.msk [vmem:[%s4 + $0x18] sm:$0xff] %vm129, %v167
    %v173 = vsel %vm129, %v160, 0.0
    %v174 = vsel %vm129, %v162, 0.0
    %v175 = vadd.f32 %v173, %v174
    %v176 = vsel %vm129, %v165, 0.0
    %v177 = vadd.f32 %v175, %v176
    %v178 = vsel %vm129, %v167, 0.0
    %v179 = vadd.f32 %v177, %v178
    %v180 = vrot.slane %v179, 4
    %v181 = vadd.f32 %v179, %v180
    %v182 = vrot.slane %v181, 2
    %v183 = vadd.f32 %v181, %v182
    %v184 = vrot.slane %v183, 1
    %v185 = vadd.f32 %v183, %v184
    %v186 = vmul.f32 %v160, %v160
    %v187 = vmul.f32 %v162, %v162
    %v188 = vmul.f32 %v165, %v165
    %v189 = vmul.f32 %v167, %v167
    %v190 = vsel %vm129, %v186, 0.0
    %v191 = vsel %vm129, %v187, 0.0
    %v192 = vadd.f32 %v190, %v191
    %v193 = vsel %vm129, %v188, 0.0
    %v194 = vadd.f32 %v192, %v193
    %v195 = vsel %vm129, %v189, 0.0
    %v196 = vadd.f32 %v194, %v195
    %v197 = vrot.slane %v196, 4
    %v198 = vadd.f32 %v196, %v197
    %v199 = vrot.slane %v198, 2
    %v200 = vadd.f32 %v198, %v199
    %v201 = vrot.slane %v200, 1
    %v202 = vadd.f32 %v200, %v201
    %vm203 = vcmask 1040384
    %v204 = vsel %vm203, %v185, %v202
    %vm205 = vcmask 58368
    %206 = vst.msk [vmem:[#allocation2] sm:$0x3] %vm205, %v204
    // Predicated region
    $region18: #{tpu_custom_call.1} parent=1 // pred_check
      _
    $region19: #{tpu_custom_call.1} parent=1 // pred_check_branch
      %208 = sbr.rel (0) target = $region21
    $region20: #{tpu_custom_call.1} parent=1 // pred_region
      _
    $region21: #{tpu_custom_call.1} parent=1 // pred_fallthru
      _
    // Predicated region
    $region22: #{tpu_custom_call.1} parent=1 // pred_check
      _
    $region23: #{tpu_custom_call.1} parent=1 // pred_check_branch
      %210 = sbr.rel (0) target = $region25
    $region24: #{tpu_custom_call.1} parent=1 // pred_region
      %212 = vsyncadd [#allocation3], 0
      %s214 = sshll.u32 [#allocation2], 4
      %s215 = int_to_ptr.vmem [resolvable:$true] %s214
      %s216 = sshll.u32 %s5, 4
      %s217 = int_to_ptr.hbm [resolvable:$true] %s216
      %219 = dma.vmem_to_hbm [thread:$0]  %s215, 32, %s217, [#allocation3]
    $region25: #{tpu_custom_call.1} parent=1 // pred_fallthru
      _
    // Predicated region
    $region26: #{tpu_custom_call.1} parent=1 // pred_check
      _
    $region27: #{tpu_custom_call.1} parent=1 // pred_check_branch
      %221 = sbr.rel (0) target = $region29
    $region28: #{tpu_custom_call.1} parent=1 // pred_region
      _
    $region29: #{tpu_custom_call.1} parent=1 // pred_fallthru
      _
    // Predicated region
    $region30: #{tpu_custom_call.1} parent=1 // pred_check
      _
    $region31: #{tpu_custom_call.1} parent=1 // pred_check_branch
      %223 = sbr.rel (0) target = $region33
    $region32: #{tpu_custom_call.1} parent=1 // pred_region
      %225 = dma.done [#allocation3], 32
    $region33: #{tpu_custom_call.1} parent=1 // pred_fallthru
      _
    %226 = vsyncpa [#allocation3], 1

</llo_original>
